<compile_context>
chip_gen: v6e
topology: v6e:2x2x1
jax: 0.10.0
libtpu: 0.0.40
codegen_flags: <defaults>
</compile_context>

<pallas_src>
import functools

import jax
import jax.numpy as jnp
from jax.experimental import pallas as pl
from jax.experimental.pallas import tpu as pltpu

_W0 = 1.0 / 16.0   # tap weights of [1, 4, 6, 4, 1] / 16
_W1 = 4.0 / 16.0
_W2 = 6.0 / 16.0

_HALO = 8          # halo blocks are 8 rows (sublane-tile aligned); only 2 rows are used


# --------------------------------------------------------------------------- #
# in-kernel helpers (shared by the fast path and the strip path)
# --------------------------------------------------------------------------- #
def _vblur(c, top2, bot2):
    """Vertical 5-tap blur of c (R, W); top2/bot2 hold rows (-2,-1) / (R,R+1)."""
    r = c.shape[0]
    xm2 = jnp.concatenate([top2, c[: r - 2]], axis=0)        # row i -> x[i-2]
    xm1 = jnp.concatenate([top2[1:2], c[: r - 1]], axis=0)   # row i -> x[i-1]
    xp1 = jnp.concatenate([c[1:], bot2[0:1]], axis=0)        # row i -> x[i+1]
    xp2 = jnp.concatenate([c[2:], bot2], axis=0)             # row i -> x[i+2]
    return _W0 * (xm2 + xp2) + _W1 * (xm1 + xp1) + _W2 * c


def _hblur_cyclic(v):
    """Horizontal 5-tap with cyclic wrap (XLU rolls). Cols 0,1,W-2,W-1 are wrong."""
    w = v.shape[1]
    vm1 = pltpu.roll(v, 1, 1)        # col j <- v[:, j-1]
    vm2 = pltpu.roll(v, 2, 1)        # col j <- v[:, j-2]
    vp1 = pltpu.roll(v, w - 1, 1)    # col j <- v[:, j+1]
    vp2 = pltpu.roll(v, w - 2, 1)    # col j <- v[:, j+2]
    return _W0 * (vm2 + vp2) + _W1 * (vm1 + vp1) + _W2 * v


def _store_with_edge_cols(out_ref, v, h):
    """Store the full-width cyclic result, then patch the 4 reflect-101 columns."""
    w = v.shape[1]
    out_ref[...] = h.astype(out_ref.dtype)
    # reflect-101 columns: x[-1]=x[1], x[-2]=x[2], x[W]=x[W-2], x[W+1]=x[W-3]
    c0, c1, c2, c3 = v[:, 0:1], v[:, 1:2], v[:, 2:3], v[:, 3:4]
    out_ref[:, 0:1] = (_W2 * c0 + (2.0 * _W1) * c1
                       + (2.0 * _W0) * c2).astype(out_ref.dtype)
    out_ref[:, 1:2] = (_W1 * c0 + (_W0 + _W2) * c1
                       + _W1 * c2 + _W0 * c3).astype(out_ref.dtype)
    d1, d2, d3, d4 = v[:, w - 1:w], v[:, w - 2:w - 1], v[:, w - 3:w - 2], v[:, w - 4:w - 3]
    out_ref[:, w - 2:w - 1] = (_W0 * d4 + _W1 * d3 + (_W2 + _W0) * d2
                               + _W1 * d1).astype(out_ref.dtype)
    out_ref[:, w - 1:w] = ((2.0 * _W0) * d3 + (2.0 * _W1) * d2
                           + _W2 * d1).astype(out_ref.dtype)


# --------------------------------------------------------------------------- #
# kernels
# --------------------------------------------------------------------------- #
def _gauss5x5_full_kernel(x_ref, out_ref):
    """Whole-channel fast path: one (H, W) block per grid step, no halos."""
    c = x_ref[...].astype(jnp.float32)
    hgt = c.shape[0]
    top2 = jnp.concatenate([c[2:3], c[1:2]], axis=0)                  # x[-2], x[-1]
    bot2 = jnp.concatenate([c[hgt - 2:hgt - 1], c[hgt - 3:hgt - 2]], axis=0)  # x[H], x[H+1]
    v = _vblur(c, top2, bot2)
    h = _hblur_cyclic(v)
    _store_with_edge_cols(out_ref, v, h)


def _gauss5x5_strip_kernel(nstrips, top_ref, cur_ref, bot_ref, out_ref):
    """Row-strip path: cur_ref is (th, W); top/bot are 8-row clamped halo blocks."""
    strip = pl.program_id(0) % nstrips
    c = cur_ref[...].astype(jnp.float32)
    th = c.shape[0]

    t_load = top_ref[_HALO - 2:_HALO, :].astype(jnp.float32)      # rows strip*th-2, -1
    b_load = bot_ref[0:2, :].astype(jnp.float32)                  # rows (strip+1)*th, +1
    t_reflect = jnp.concatenate([c[2:3], c[1:2]], axis=0)                       # image top
    b_reflect = jnp.concatenate([c[th - 2:th - 1], c[th - 3:th - 2]], axis=0)   # image bottom
    top2 = jnp.where(strip == 0, t_reflect, t_load)               # tiny (2, W) selects
    bot2 = jnp.where(strip == nstrips - 1, b_reflect, b_load)

    v = _vblur(c, top2, bot2)
    h = _hblur_cyclic(v)
    _store_with_edge_cols(out_ref, v, h)


# --------------------------------------------------------------------------- #
# host-side tiling policy
# --------------------------------------------------------------------------- #
def _vmem_capacity_bytes():
    try:
        return int(pltpu.get_tpu_info().vmem_capacity_bytes)
    except Exception:
        return 64 * 1024 * 1024   # v7x per-TensorCore VMEM — smallest generation


def _step_bytes(rows, width, dsize):
    # 2x double-buffered input strip + 2x output strip + ~6 live f32 temporaries
    # (vertical taps / v / rolled h) + double-buffered 8-row halo blocks.
    return rows * width * (4 * dsize + 6 * 4) + 4 * _HALO * width * dsize


def _pick_strip_rows(H, W, dsize, budget):
    """Largest multiple-of-8 divisor of H whose per-step working set fits budget."""
    best = 0
    for cand in range(8, H + 1, 8):
        if H % cand == 0 and _step_bytes(cand, W, dsize) <= budget:
            best = cand
    if best == 0:
        raise ValueError("image too wide for the available VMEM budget")
    return best


@functools.partial(jax.jit, static_argnames=("strip_rows",))
def denoiser_gaussian_forward(x, strip_rows=None):
    """Pallas TPU equivalent of Denoiser(GAUSSIAN)(x) for a (C, H, W) float tensor."""
    if x.ndim != 3:
        raise ValueError("expected a (C, H, W) tensor")
    if not jnp.issubdtype(x.dtype, jnp.floating):
        # TODO(synk): integer (uint8) inputs need round-to-nearest to match cv2.
        raise ValueError("only floating-point inputs are supported")
    C, H, W = x.shape
    if H < 4 or W < 4:
        raise ValueError("need H >= 4 and W >= 4 for a 5x5 reflect-101 blur")
    dsize = jnp.dtype(x.dtype).itemsize

    cap = _vmem_capacity_bytes()
    vmem_limit = int(min((cap * 5) // 8, 100 * 1024 * 1024))   # ~80 MiB on 128-MiB parts, ~40 MiB on v7x
    work_budget = vmem_limit // 2
    compiler_params = pltpu.CompilerParams(
        dimension_semantics=("parallel",),
        vmem_limit_bytes=vmem_limit,
    )

    use_fast = (strip_rows is None and _step_bytes(H, W, dsize) <= work_budget) or \
               (strip_rows is not None and int(strip_rows) >= H)

    if use_fast:
        # Whole-channel fast path: no halo DMAs, no strip branching, any H >= 4.
        return pl.pallas_call(
            _gauss5x5_full_kernel,
            out_shape=jax.ShapeDtypeStruct((C, H, W), x.dtype),
            grid=(C,),
            in_specs=[pl.BlockSpec((None, H, W), lambda p: (p, 0, 0))],
            out_specs=pl.BlockSpec((None, H, W), lambda p: (p, 0, 0)),
            compiler_params=compiler_params,
        )(x)

    # ---------------- strip path ----------------
    if H % 8 != 0:
        # TODO(synk): ragged H (not a multiple of 8) needs masked tail strips.
        raise ValueError("strip path requires H to be a multiple of 8")
    if strip_rows is None:
        strip_rows = _pick_strip_rows(H, W, dsize, work_budget)
    th = int(strip_rows)
    if th % 8 != 0 or H % th != 0:
        raise ValueError("strip_rows must be a multiple of 8 that divides H")
    nstrips = H // th
    hb = _HALO
    hblocks = H // hb

    kernel = functools.partial(_gauss5x5_strip_kernel, nstrips)

    def cur_map(p):
        return (p // nstrips, p % nstrips, 0)

    def top_map(p):   # 8-row block ending just above the strip (clamped at the top)
        i = p % nstrips
        return (p // nstrips, jnp.maximum(i * (th // hb) - 1, 0), 0)

    def bot_map(p):   # 8-row block starting just below the strip (clamped at the bottom)
        i = p % nstrips
        return (p // nstrips, jnp.minimum((i + 1) * (th // hb), hblocks - 1), 0)

    fn = pl.pallas_call(
        kernel,
        out_shape=jax.ShapeDtypeStruct((C, H, W), x.dtype),
        grid=(C * nstrips,),   # flattened: both v7x TensorCores get ~equal step counts
        in_specs=[
            pl.BlockSpec((None, hb, W), top_map),
            pl.BlockSpec((None, th, W), cur_map),
            pl.BlockSpec((None, hb, W), bot_map),
        ],
        out_specs=pl.BlockSpec((None, th, W), cur_map),
        compiler_params=compiler_params,
    )
    # The same array is read through three BlockSpecs (top halo / strip / bottom halo).
    return fn(x, x, x)


# --------------------------------------------------------------------------- #
# pure-JAX reference and self-test
# --------------------------------------------------------------------------- #
def _reference_gaussian_blur_5x5(x):
    """Separable [1,4,6,4,1]/16 blur with reflect-101 borders (cv2 default)."""
    w = jnp.array([1.0, 4.0, 6.0, 4.0, 1.0], jnp.float32) / 16.0
    xp = jnp.pad(x.astype(jnp.float32), ((0, 0), (2, 2), (2, 2)), mode="reflect")
    H, Wd = x.shape[1], x.shape[2]
    v = sum(w[k] * xp[:, k:k + H, :] for k in range(5))
    out = sum(w[k] * v[:, :, k:k + Wd] for k in range(5))
    return out.astype(x.dtype)


if __name__ == "__main__":
    key = jax.random.PRNGKey(0)
    C, H, W = 3, 64, 256                       # small, lane-dense (W % 128 == 0)
    x = jax.random.uniform(key, (C, H, W), dtype=jnp.float32)

    # Fast path: whole (H, W) channel per grid step.
    y_fast = jax.block_until_ready(denoiser_gaussian_forward(x))
    # Strip path: strip_rows=16 -> 4 strips/channel; exercises first / interior /
    # last strip halo handling and the flattened pipelined grid.
    y_strip = jax.block_until_ready(denoiser_gaussian_forward(x, strip_rows=16))

    y_ref = _reference_gaussian_blur_5x5(x)
    for name, y in (("fast", y_fast), ("strip", y_strip)):
        assert y.shape == x.shape and y.dtype == x.dtype
        err = float(jnp.max(jnp.abs(y.astype(jnp.float32) - y_ref.astype(jnp.float32))))
        if err > 1e-4:
            raise AssertionError(f"Pallas Gaussian blur mismatch ({name} path): max abs err {err}")
    print("KERNEL_OK")
</pallas_src>

<mosaic_0001>
module attributes {stable_mosaic.version = 11 : i64} {
  func.func @_gauss5x5_full_kernel(%arg0: i32, %arg1: memref<1x64x256xf32, #tpu.memory_space<vmem>>, %arg2: memref<1x64x256xf32, #tpu.memory_space<vmem>>) attributes {dimension_semantics = [#tpu.dimension_semantics<parallel>], iteration_bounds = array<i64: 3>, scalar_prefetch = 0 : i64, scratch_operands = 0 : i64, tpu.core_type = #tpu.core_type<tc>, window_params = [{transform_indices = @transform_0, window_bounds = array<i64: 1, 64, 256>}, {transform_indices = @transform_1, window_bounds = array<i64: 1, 64, 256>}]} {
    %c0 = arith.constant 0 : index
    %c0_0 = arith.constant 0 : index
    %c0_1 = arith.constant 0 : index
    %0 = vector.load %arg1[%c0, %c0_0, %c0_1] : memref<1x64x256xf32, #tpu.memory_space<vmem>>, vector<1x64x256xf32>
    %1 = vector.shape_cast %0 : vector<1x64x256xf32> to vector<64x256xf32>
    %2 = vector.extract_strided_slice %1 {offsets = [2, 0], sizes = [1, 256], strides = [1, 1]} : vector<64x256xf32> to vector<1x256xf32>
    %3 = vector.extract_strided_slice %1 {offsets = [1, 0], sizes = [1, 256], strides = [1, 1]} : vector<64x256xf32> to vector<1x256xf32>
    %4 = tpu.concatenate %2, %3 in 0 : vector<1x256xf32>, vector<1x256xf32> -> vector<2x256xf32>
    %5 = vector.extract_strided_slice %1 {offsets = [62, 0], sizes = [1, 256], strides = [1, 1]} : vector<64x256xf32> to vector<1x256xf32>
    %6 = vector.extract_strided_slice %1 {offsets = [61, 0], sizes = [1, 256], strides = [1, 1]} : vector<64x256xf32> to vector<1x256xf32>
    %7 = tpu.concatenate %5, %6 in 0 : vector<1x256xf32>, vector<1x256xf32> -> vector<2x256xf32>
    %8 = vector.extract_strided_slice %1 {offsets = [0, 0], sizes = [62, 256], strides = [1, 1]} : vector<64x256xf32> to vector<62x256xf32>
    %9 = tpu.concatenate %4, %8 in 0 : vector<2x256xf32>, vector<62x256xf32> -> vector<64x256xf32>
    %10 = vector.extract_strided_slice %4 {offsets = [1, 0], sizes = [1, 256], strides = [1, 1]} : vector<2x256xf32> to vector<1x256xf32>
    %11 = vector.extract_strided_slice %1 {offsets = [0, 0], sizes = [63, 256], strides = [1, 1]} : vector<64x256xf32> to vector<63x256xf32>
    %12 = tpu.concatenate %10, %11 in 0 : vector<1x256xf32>, vector<63x256xf32> -> vector<64x256xf32>
    %13 = vector.extract_strided_slice %1 {offsets = [1, 0], sizes = [63, 256], strides = [1, 1]} : vector<64x256xf32> to vector<63x256xf32>
    %14 = vector.extract_strided_slice %7 {offsets = [0, 0], sizes = [1, 256], strides = [1, 1]} : vector<2x256xf32> to vector<1x256xf32>
    %15 = tpu.concatenate %13, %14 in 0 : vector<63x256xf32>, vector<1x256xf32> -> vector<64x256xf32>
    %16 = vector.extract_strided_slice %1 {offsets = [2, 0], sizes = [62, 256], strides = [1, 1]} : vector<64x256xf32> to vector<62x256xf32>
    %17 = tpu.concatenate %16, %7 in 0 : vector<62x256xf32>, vector<2x256xf32> -> vector<64x256xf32>
    %18 = arith.addf %9, %17 : vector<64x256xf32>
    %cst = arith.constant 6.250000e-02 : f32
    %19 = vector.broadcast %cst : f32 to vector<64x256xf32>
    %20 = arith.mulf %19, %18 : vector<64x256xf32>
    %21 = arith.addf %12, %15 : vector<64x256xf32>
    %cst_2 = arith.constant 2.500000e-01 : f32
    %22 = vector.broadcast %cst_2 : f32 to vector<64x256xf32>
    %23 = arith.mulf %22, %21 : vector<64x256xf32>
    %24 = arith.addf %20, %23 : vector<64x256xf32>
    %cst_3 = arith.constant 3.750000e-01 : f32
    %25 = vector.broadcast %cst_3 : f32 to vector<64x256xf32>
    %26 = arith.mulf %25, %1 : vector<64x256xf32>
    %27 = arith.addf %24, %26 : vector<64x256xf32>
    %c1_i32 = arith.constant 1 : i32
    %28 = tpu.dynamic_rotate %27 by %c1_i32 dim 1 : vector<64x256xf32>, i32 -> vector<64x256xf32>
    %c2_i32 = arith.constant 2 : i32
    %29 = tpu.dynamic_rotate %27 by %c2_i32 dim 1 : vector<64x256xf32>, i32 -> vector<64x256xf32>
    %c255_i32 = arith.constant 255 : i32
    %30 = tpu.dynamic_rotate %27 by %c255_i32 dim 1 : vector<64x256xf32>, i32 -> vector<64x256xf32>
    %c254_i32 = arith.constant 254 : i32
    %31 = tpu.dynamic_rotate %27 by %c254_i32 dim 1 : vector<64x256xf32>, i32 -> vector<64x256xf32>
    %32 = arith.addf %29, %31 : vector<64x256xf32>
    %cst_4 = arith.constant 6.250000e-02 : f32
    %33 = vector.broadcast %cst_4 : f32 to vector<64x256xf32>
    %34 = arith.mulf %33, %32 : vector<64x256xf32>
    %35 = arith.addf %28, %30 : vector<64x256xf32>
    %cst_5 = arith.constant 2.500000e-01 : f32
    %36 = vector.broadcast %cst_5 : f32 to vector<64x256xf32>
    %37 = arith.mulf %36, %35 : vector<64x256xf32>
    %38 = arith.addf %34, %37 : vector<64x256xf32>
    %cst_6 = arith.constant 3.750000e-01 : f32
    %39 = vector.broadcast %cst_6 : f32 to vector<64x256xf32>
    %40 = arith.mulf %39, %27 : vector<64x256xf32>
    %41 = arith.addf %38, %40 : vector<64x256xf32>
    %c0_7 = arith.constant 0 : index
    %c0_8 = arith.constant 0 : index
    %c0_9 = arith.constant 0 : index
    %42 = vector.load %arg2[%c0_7, %c0_8, %c0_9] : memref<1x64x256xf32, #tpu.memory_space<vmem>>, vector<1x64x256xf32>
    %43 = vector.shape_cast %42 : vector<1x64x256xf32> to vector<64x256xf32>
    %44 = vector.shape_cast %41 : vector<64x256xf32> to vector<1x64x256xf32>
    tpu.vector_store %arg2[%c0_7, %c0_8, %c0_9], %44 {strides = array<i32>} : memref<1x64x256xf32, #tpu.memory_space<vmem>>, vector<1x64x256xf32>,
    %45 = vector.extract_strided_slice %27 {offsets = [0, 0], sizes = [64, 1], strides = [1, 1]} : vector<64x256xf32> to vector<64x1xf32>
    %46 = vector.extract_strided_slice %27 {offsets = [0, 1], sizes = [64, 1], strides = [1, 1]} : vector<64x256xf32> to vector<64x1xf32>
    %47 = vector.extract_strided_slice %27 {offsets = [0, 2], sizes = [64, 1], strides = [1, 1]} : vector<64x256xf32> to vector<64x1xf32>
    %48 = vector.extract_strided_slice %27 {offsets = [0, 3], sizes = [64, 1], strides = [1, 1]} : vector<64x256xf32> to vector<64x1xf32>
    %cst_10 = arith.constant 3.750000e-01 : f32
    %49 = vector.broadcast %cst_10 : f32 to vector<64x1xf32>
    %50 = arith.mulf %49, %45 : vector<64x1xf32>
    %cst_11 = arith.constant 5.000000e-01 : f32
    %51 = vector.broadcast %cst_11 : f32 to vector<64x1xf32>
    %52 = arith.mulf %51, %46 : vector<64x1xf32>
    %53 = arith.addf %50, %52 : vector<64x1xf32>
    %cst_12 = arith.constant 1.250000e-01 : f32
    %54 = vector.broadcast %cst_12 : f32 to vector<64x1xf32>
    %55 = arith.mulf %54, %47 : vector<64x1xf32>
    %56 = arith.addf %53, %55 : vector<64x1xf32>
    %c0_13 = arith.constant 0 : index
    %c0_14 = arith.constant 0 : index
    %c0_15 = arith.constant 0 : index
    %57 = vector.load %arg2[%c0_13, %c0_14, %c0_15] : memref<1x64x256xf32, #tpu.memory_space<vmem>>, vector<1x64x1xf32>
    %58 = vector.shape_cast %57 : vector<1x64x1xf32> to vector<64x1xf32>
    %59 = vector.shape_cast %56 : vector<64x1xf32> to vector<1x64x1xf32>
    tpu.vector_store %arg2[%c0_13, %c0_14, %c0_15], %59 {strides = array<i32>} : memref<1x64x256xf32, #tpu.memory_space<vmem>>, vector<1x64x1xf32>,
    %cst_16 = arith.constant 2.500000e-01 : f32
    %60 = vector.broadcast %cst_16 : f32 to vector<64x1xf32>
    %61 = arith.mulf %60, %45 : vector<64x1xf32>
    %cst_17 = arith.constant 4.375000e-01 : f32
    %62 = vector.broadcast %cst_17 : f32 to vector<64x1xf32>
    %63 = arith.mulf %62, %46 : vector<64x1xf32>
    %64 = arith.addf %61, %63 : vector<64x1xf32>
    %cst_18 = arith.constant 2.500000e-01 : f32
    %65 = vector.broadcast %cst_18 : f32 to vector<64x1xf32>
    %66 = arith.mulf %65, %47 : vector<64x1xf32>
    %67 = arith.addf %64, %66 : vector<64x1xf32>
    %cst_19 = arith.constant 6.250000e-02 : f32
    %68 = vector.broadcast %cst_19 : f32 to vector<64x1xf32>
    %69 = arith.mulf %68, %48 : vector<64x1xf32>
    %70 = arith.addf %67, %69 : vector<64x1xf32>
    %c0_20 = arith.constant 0 : index
    %c0_21 = arith.constant 0 : index
    %c1 = arith.constant 1 : index
    %71 = vector.load %arg2[%c0_20, %c0_21, %c1] : memref<1x64x256xf32, #tpu.memory_space<vmem>>, vector<1x64x1xf32>
    %72 = vector.shape_cast %71 : vector<1x64x1xf32> to vector<64x1xf32>
    %73 = vector.shape_cast %70 : vector<64x1xf32> to vector<1x64x1xf32>
    tpu.vector_store %arg2[%c0_20, %c0_21, %c1], %73 {strides = array<i32>} : memref<1x64x256xf32, #tpu.memory_space<vmem>>, vector<1x64x1xf32>,
    %74 = vector.extract_strided_slice %27 {offsets = [0, 255], sizes = [64, 1], strides = [1, 1]} : vector<64x256xf32> to vector<64x1xf32>
    %75 = vector.extract_strided_slice %27 {offsets = [0, 254], sizes = [64, 1], strides = [1, 1]} : vector<64x256xf32> to vector<64x1xf32>
    %76 = vector.extract_strided_slice %27 {offsets = [0, 253], sizes = [64, 1], strides = [1, 1]} : vector<64x256xf32> to vector<64x1xf32>
    %77 = vector.extract_strided_slice %27 {offsets = [0, 252], sizes = [64, 1], strides = [1, 1]} : vector<64x256xf32> to vector<64x1xf32>
    %cst_22 = arith.constant 6.250000e-02 : f32
    %78 = vector.broadcast %cst_22 : f32 to vector<64x1xf32>
    %79 = arith.mulf %78, %77 : vector<64x1xf32>
    %cst_23 = arith.constant 2.500000e-01 : f32
    %80 = vector.broadcast %cst_23 : f32 to vector<64x1xf32>
    %81 = arith.mulf %80, %76 : vector<64x1xf32>
    %82 = arith.addf %79, %81 : vector<64x1xf32>
    %cst_24 = arith.constant 4.375000e-01 : f32
    %83 = vector.broadcast %cst_24 : f32 to vector<64x1xf32>
    %84 = arith.mulf %83, %75 : vector<64x1xf32>
    %85 = arith.addf %82, %84 : vector<64x1xf32>
    %cst_25 = arith.constant 2.500000e-01 : f32
    %86 = vector.broadcast %cst_25 : f32 to vector<64x1xf32>
    %87 = arith.mulf %86, %74 : vector<64x1xf32>
    %88 = arith.addf %85, %87 : vector<64x1xf32>
    %c0_26 = arith.constant 0 : index
    %c0_27 = arith.constant 0 : index
    %c254 = arith.constant 254 : index
    %89 = vector.load %arg2[%c0_26, %c0_27, %c254] : memref<1x64x256xf32, #tpu.memory_space<vmem>>, vector<1x64x1xf32>
    %90 = vector.shape_cast %89 : vector<1x64x1xf32> to vector<64x1xf32>
    %91 = vector.shape_cast %88 : vector<64x1xf32> to vector<1x64x1xf32>
    tpu.vector_store %arg2[%c0_26, %c0_27, %c254], %91 {strides = array<i32>} : memref<1x64x256xf32, #tpu.memory_space<vmem>>, vector<1x64x1xf32>,
    %cst_28 = arith.constant 1.250000e-01 : f32
    %92 = vector.broadcast %cst_28 : f32 to vector<64x1xf32>
    %93 = arith.mulf %92, %76 : vector<64x1xf32>
    %cst_29 = arith.constant 5.000000e-01 : f32
    %94 = vector.broadcast %cst_29 : f32 to vector<64x1xf32>
    %95 = arith.mulf %94, %75 : vector<64x1xf32>
    %96 = arith.addf %93, %95 : vector<64x1xf32>
    %cst_30 = arith.constant 3.750000e-01 : f32
    %97 = vector.broadcast %cst_30 : f32 to vector<64x1xf32>
    %98 = arith.mulf %97, %74 : vector<64x1xf32>
    %99 = arith.addf %96, %98 : vector<64x1xf32>
    %c0_31 = arith.constant 0 : index
    %c0_32 = arith.constant 0 : index
    %c255 = arith.constant 255 : index
    %100 = vector.load %arg2[%c0_31, %c0_32, %c255] : memref<1x64x256xf32, #tpu.memory_space<vmem>>, vector<1x64x1xf32>
    %101 = vector.shape_cast %100 : vector<1x64x1xf32> to vector<64x1xf32>
    %102 = vector.shape_cast %99 : vector<64x1xf32> to vector<1x64x1xf32>
    tpu.vector_store %arg2[%c0_31, %c0_32, %c255], %102 {strides = array<i32>} : memref<1x64x256xf32, #tpu.memory_space<vmem>>, vector<1x64x1xf32>,
    return
  }
  func.func @transform_0(%arg0: i32) -> (i32, i32, i32) {
    %c0_i32 = arith.constant 0 : i32
    %c0_i32_0 = arith.constant 0 : i32
    %c0_i32_1 = arith.constant 0 : i32
    return %arg0, %c0_i32, %c0_i32_0 : i32, i32, i32
  }
  func.func @transform_1(%arg0: i32) -> (i32, i32, i32) {
    %c0_i32 = arith.constant 0 : i32
    %c0_i32_0 = arith.constant 0 : i32
    %c0_i32_1 = arith.constant 0 : i32
    return %arg0, %c0_i32, %c0_i32_0 : i32, i32, i32
  }
}

</mosaic_0001>

<llo_original>
// kernel: denoiser_gaussian_forward.1
$region0: #{denoiser_gaussian_forward.1}
  #allocation0 [shape = 'u32[]', space=smem, size = 0x4, offset = 0x4, fixed_abs, tag = 'smem constant byte address 0x4 - core index']
  #allocation1 [shape = 'u32[144,128]{1,0:T(1,128)}', space=vmem, size = 0x12000, scoped, tag = 'internal scratch']
  %s0 = inlined_call_operand.hbm [shape: f32[3,64,256], index: 0, kind: input, shape index: {}]
  %s1 = inlined_call_operand.hbm [shape: f32[3,64,256], index: 1, kind: output, shape index: {}]
  %s2 = sld [smem:[#allocation0]]
  $region41: #{denoiser_gaussian_forward.1} parent=0
    _
  %s4 = ssub.s32 1, %s2
  %s5 = scalar_select 0, %s4, %s2
  $region1: #{denoiser_gaussian_forward.1} parent=0
    #allocation2 [shape = 'u8[131072]{0}', space=vmem, size = 0x20000, scoped, tag = 'input window, operand 0']
    #allocation3 [shape = 's32[2]{0}', space=sflag, size = 0x8, scoped, tag = 'scoped memory for denoiser_gaussian_forward.1']
    #allocation4 [shape = 's32[2]{0}', space=sflag, size = 0x8, scoped, tag = 'scoped memory for denoiser_gaussian_forward.1']
    #allocation5 [shape = 'u8[131072]{0}', space=vmem, size = 0x20000, scoped, tag = 'output window, operand 0']
    %6 = vsyncpa [#allocation3], 0
    %s7 = scalar_lea.sflag [#allocation3], 1
    %8 = vsyncpa %s7, 0
    %9 = vsyncpa [#allocation4], 0
    %s10 = scalar_lea.sflag [#allocation4], 1
    %11 = vsyncpa %s10, 0
    loop: start=0, step=1, limit=5
    $region2: #{denoiser_gaussian_forward.1} parent=1 // loop_pre_header
      _
    $region3: #{denoiser_gaussian_forward.1} parent=1 // loop_header
      %s13 = sphi 0, %s17
      %p14 = scmp.ge.s32.totalorder %s13, 5
      %s23 = sphi 0, %s25
      %s26 = sphi 0, %s23
      %s27 = sphi 0, %s26
      %s43 = sphi 0, %s27
      %s49 = sphi 0, %s51
      %s52 = sphi 0, %s49
      %s53 = sphi 0, %s52
      %s69 = sphi 0, %s53
    $region4: #{denoiser_gaussian_forward.1} parent=1 // loop_header_branch
      %16 = sbr.rel (%p14) target = $region8
    $region5: #{denoiser_gaussian_forward.1} parent=1 // loop_body
      %s18 = ssub.s32 %s13, 1
      %s19 = ssub.s32 %s13, 2
      %s20 = sadd.s32 %s13, 1
      %s21 = ssub.s32 %s13, %s20
      %p22 = scmp.eq.s32.totalorder %s21, 0
      %s24 = sadd.s32 %s23, 1
      %s25 = scalar_select %p22, %s23, %s24
      %p28 = pneg %p22
      %p29 = scmp.eq.s32.totalorder %s13, 2
      %p30 = por %p28, %p29
      %p31 = scmp.ne.s32.totalorder %s23, %s26
      %p32 = scmp.eq.s32.totalorder %s13, 0
      %p33 = por %p31, %p32
      %p34 = scmp.ne.s32.totalorder %s23, %s26
      %p35 = scmp.eq.s32.totalorder %s18, 2
      %p36 = por %p34, %p35
      %p37 = scmp.ne.s32.totalorder %s26, %s27
      %p38 = scmp.eq.s32.totalorder %s18, 0
      %p39 = por %p37, %p38
      %p40 = scmp.ne.s32.totalorder %s26, %s27
      %p41 = scmp.eq.s32.totalorder %s19, 2
      %p42 = por %p40, %p41
      %p44 = scmp.ne.s32.totalorder %s27, %s43
      %p45 = scmp.eq.s32.totalorder %s19, 0
      %p46 = por %p44, %p45
      %s47 = ssub.s32 %s13, %s20
      %p48 = scmp.eq.s32.totalorder %s47, 0
      %s50 = sadd.s32 %s49, 1
      %s51 = scalar_select %p48, %s49, %s50
      %p54 = pneg %p48
      %p55 = scmp.eq.s32.totalorder %s13, 2
      %p56 = por %p54, %p55
      %p57 = scmp.ne.s32.totalorder %s49, %s52
      %p58 = scmp.eq.s32.totalorder %s13, 0
      %p59 = por %p57, %p58
      %p60 = scmp.ne.s32.totalorder %s49, %s52
      %p61 = scmp.eq.s32.totalorder %s18, 2
      %p62 = por %p60, %p61
      %p63 = scmp.ne.s32.totalorder %s52, %s53
      %p64 = scmp.eq.s32.totalorder %s18, 0
      %p65 = por %p63, %p64
      %p66 = scmp.ne.s32.totalorder %s52, %s53
      %p67 = scmp.eq.s32.totalorder %s19, 2
      %p68 = por %p66, %p67
      %p70 = scmp.ne.s32.totalorder %s53, %s69
      %p71 = scmp.eq.s32.totalorder %s19, 0
      %p72 = por %p70, %p71
      %p73 = scmp.le.s32.totalorder 1, %s13
      %p74 = scmp.lt.s32.totalorder %s13, 4
      %p75 = pnand %p73, %p74
      %p76 = pneg %p75
      // Predicated region
      $region9: #{denoiser_gaussian_forward.1} parent=5 // pred_check
        _
      $region10: #{denoiser_gaussian_forward.1} parent=5 // pred_check_branch
        %78 = sbr.rel (%p75) target = $region12
      $region11: #{denoiser_gaussian_forward.1} parent=5 // pred_region
        %s79 = ssub.s32 %s13, 1
      $region12: #{denoiser_gaussian_forward.1} parent=5 // pred_fallthru
        _
      %p80 = scmp.lt.s32.totalorder %s13, 3
      // Predicated region
      $region13: #{denoiser_gaussian_forward.1} parent=5 // pred_check
        %p81 = pneg %p80
      $region14: #{denoiser_gaussian_forward.1} parent=5 // pred_check_branch
        %83 = sbr.rel (%p81) target = $region16
      $region15: #{denoiser_gaussian_forward.1} parent=5 // pred_region
        // Predicated region
        $region17: #{denoiser_gaussian_forward.1} parent=15 // pred_check
          %p84 = pneg %p33
        $region18: #{denoiser_gaussian_forward.1} parent=15 // pred_check_branch
          %86 = sbr.rel (%p84) target = $region20
        $region19: #{denoiser_gaussian_forward.1} parent=15 // pred_region
          %s87 = sand.u32 %s23, 1
          %s88 = scalar_lea.sflag [#allocation3], %s87
          %s89 = sand.u32 %s23, 1
          %s90 = smul.addr %s89, 128
          %s91 = scalar_lea.vmem [#allocation2], %s90
          %s93 = ssub.s32 2048, 2048
          %94 = vsyncadd %s88, %s93
          %s95 = smul.addr %s13, 16
          %s96 = smul.addr %s95, 128
          %s97 = scalar_lea.hbm %s0, %s96
          %s98 = sshll.u32 %s91, 4
          %s99 = int_to_ptr.vmem [resolvable:$true] %s98
          %104 = dma.hbm_to_vmem [thread:$0]  %s97, 2048, %s99, %s88, 256, 256, 16
        $region20: #{denoiser_gaussian_forward.1} parent=15 // pred_fallthru
          _
      $region16: #{denoiser_gaussian_forward.1} parent=5 // pred_fallthru
        _
      %p105 = scmp.le.s32.totalorder 1, %s13
      %p106 = scmp.lt.s32.totalorder %s13, 4
      %p107 = pnand %p105, %p106
      %p108 = pneg %p107
      // Predicated region
      $region21: #{denoiser_gaussian_forward.1} parent=5 // pred_check
        _
      $region22: #{denoiser_gaussian_forward.1} parent=5 // pred_check_branch
        %110 = sbr.rel (%p107) target = $region24
      $region23: #{denoiser_gaussian_forward.1} parent=5 // pred_region
        %s111 = ssub.s32 %s13, 1
        %s112 = sand.u32 %s26, 1
        %s113 = scalar_lea.sflag [#allocation3], %s112
        %s114 = sand.u32 %s26, 1
        %s115 = smul.addr %s114, 128
        %s116 = scalar_lea.vmem [#allocation2], %s115
        // Predicated region
        $region25: #{denoiser_gaussian_forward.1} parent=23 // pred_check
          %p117 = pneg %p39
        $region26: #{denoiser_gaussian_forward.1} parent=23 // pred_check_branch
          %119 = sbr.rel (%p117) target = $region28
        $region27: #{denoiser_gaussian_forward.1} parent=23 // pred_region
          %120 = dma.done %s113, 2048
        $region28: #{denoiser_gaussian_forward.1} parent=23 // pred_fallthru
          _
        %s121 = sand.u32 %s26, 1
        %s122 = scalar_lea.sflag [#allocation3], %s121
        %s123 = sand.u32 %s26, 1
        %s124 = smul.addr %s123, 128
        %s125 = scalar_lea.vmem [#allocation2], %s124
        %p126 = pneg %p39
        %p127 = pneg %p36
        %p128 = pneg %p65
        %p129 = pneg %p62
        %s130 = sand.u32 %s52, 1
        %s131 = scalar_lea.sflag [#allocation4], %s130
        %s132 = sand.u32 %s52, 1
        %s133 = smul.addr %s132, 128
        %s134 = scalar_lea.vmem [#allocation5], %s133
        %v135 = vld [vmem:[%s116] sm:$0xff]
        %v136 = vld [vmem:[%s116 + $0x8] sm:$0xff]
        %v137 = vld [vmem:[%s116 + $0x10] sm:$0xff]
        %v138 = vld [vmem:[%s116 + $0x18] sm:$0xff]
        %v139 = vld [vmem:[%s116 + $0x20] sm:$0xff]
        %v140 = vld [vmem:[%s116 + $0x28] sm:$0xff]
        %v141 = vld [vmem:[%s116 + $0x30] sm:$0xff]
        %v142 = vld [vmem:[%s116 + $0x38] sm:$0xff]
        %v143 = vld [vmem:[%s116 + $0x40] sm:$0xff]
        %v144 = vld [vmem:[%s116 + $0x48] sm:$0xff]
        %v145 = vld [vmem:[%s116 + $0x50] sm:$0xff]
        %v146 = vld [vmem:[%s116 + $0x58] sm:$0xff]
        %v147 = vld [vmem:[%s116 + $0x60] sm:$0xff]
        %v148 = vld [vmem:[%s116 + $0x68] sm:$0xff]
        %v149 = vld [vmem:[%s116 + $0x70] sm:$0xff]
        %v150 = vld [vmem:[%s116 + $0x78] sm:$0xff]
        %v153 = vrot.slane %v135, 2
        %v154 = vrot.slane %v136, 2
        %vm157 = vcmask 1040384
        %v158 = vsel %vm157, %v153, %v135
        %v159 = vsel %vm157, %v154, %v136
        %v162 = vrot.slane %v149, 6
        %v163 = vrot.slane %v150, 6
        %v166 = vrot.slane %v149, 4
        %v167 = vrot.slane %v150, 4
        %v170 = vsel %vm157, %v162, %v166
        %v171 = vsel %vm157, %v163, %v167
        %vm184 = vcmask 1041408
        %v185 = vrot.slane %v135, 6
        %v186 = vrot.slane %v136, 6
        %v187 = vrot.slane %v137, 6
        %v188 = vsel %vm184, %v185, %v187
        %v189 = vrot.slane %v138, 6
        %v190 = vsel %vm184, %v186, %v189
        %v191 = vrot.slane %v139, 6
        %v192 = vsel %vm184, %v187, %v191
        %v193 = vrot.slane %v140, 6
        %v194 = vsel %vm184, %v189, %v193
        %v195 = vrot.slane %v141, 6
        %v196 = vsel %vm184, %v191, %v195
        %v197 = vrot.slane %v142, 6
        %v198 = vsel %vm184, %v193, %v197
        %v199 = vrot.slane %v143, 6
        %v200 = vsel %vm184, %v195, %v199
        %v201 = vrot.slane %v144, 6
        %v202 = vsel %vm184, %v197, %v201
        %v203 = vrot.slane %v145, 6
        %v204 = vsel %vm184, %v199, %v203
        %v205 = vrot.slane %v146, 6
        %v206 = vsel %vm184, %v201, %v205
        %v207 = vrot.slane %v147, 6
        %v208 = vsel %vm184, %v203, %v207
        %v209 = vrot.slane %v148, 6
        %v210 = vsel %vm184, %v205, %v209
        %v211 = vsel %vm184, %v207, %v162
        %v212 = vsel %vm184, %v209, %v163
        %v229 = vsel %vm184, %v158, %v185
        %v230 = vsel %vm184, %v159, %v186
        %v233 = vrot.slane %v158, 1
        %v234 = vrot.slane %v159, 1
        %v237 = vrot.slane %v135, 7
        %v238 = vrot.slane %v136, 7
        %v239 = vrot.slane %v137, 7
        %v240 = vsel %vm157, %v237, %v239
        %v241 = vrot.slane %v138, 7
        %v242 = vsel %vm157, %v238, %v241
        %v243 = vrot.slane %v139, 7
        %v244 = vsel %vm157, %v239, %v243
        %v245 = vrot.slane %v140, 7
        %v246 = vsel %vm157, %v241, %v245
        %v247 = vrot.slane %v141, 7
        %v248 = vsel %vm157, %v243, %v247
        %v249 = vrot.slane %v142, 7
        %v250 = vsel %vm157, %v245, %v249
        %v251 = vrot.slane %v143, 7
        %v252 = vsel %vm157, %v247, %v251
        %v253 = vrot.slane %v144, 7
        %v254 = vsel %vm157, %v249, %v253
        %v255 = vrot.slane %v145, 7
        %v256 = vsel %vm157, %v251, %v255
        %v257 = vrot.slane %v146, 7
        %v258 = vsel %vm157, %v253, %v257
        %v259 = vrot.slane %v147, 7
        %v260 = vsel %vm157, %v255, %v259
        %v261 = vrot.slane %v148, 7
        %v262 = vsel %vm157, %v257, %v261
        %v263 = vrot.slane %v149, 7
        %v264 = vsel %vm157, %v259, %v263
        %v265 = vrot.slane %v150, 7
        %v266 = vsel %vm157, %v261, %v265
        %v283 = vsel %vm157, %v233, %v237
        %v284 = vsel %vm157, %v234, %v238
        %vm285 = vcmask 1046528
        %v286 = vrot.slane %v135, 1
        %v287 = vrot.slane %v137, 1
        %v288 = vsel %vm285, %v286, %v287
        %v289 = vrot.slane %v136, 1
        %v290 = vrot.slane %v138, 1
        %v291 = vsel %vm285, %v289, %v290
        %v292 = vrot.slane %v139, 1
        %v293 = vsel %vm285, %v287, %v292
        %v294 = vrot.slane %v140, 1
        %v295 = vsel %vm285, %v290, %v294
        %v296 = vrot.slane %v141, 1
        %v297 = vsel %vm285, %v292, %v296
        %v298 = vrot.slane %v142, 1
        %v299 = vsel %vm285, %v294, %v298
        %v300 = vrot.slane %v143, 1
        %v301 = vsel %vm285, %v296, %v300
        %v302 = vrot.slane %v144, 1
        %v303 = vsel %vm285, %v298, %v302
        %v304 = vrot.slane %v145, 1
        %v305 = vsel %vm285, %v300, %v304
        %v306 = vrot.slane %v146, 1
        %v307 = vsel %vm285, %v302, %v306
        %v308 = vrot.slane %v147, 1
        %v309 = vsel %vm285, %v304, %v308
        %v310 = vrot.slane %v148, 1
        %v311 = vsel %vm285, %v306, %v310
        %v312 = vrot.slane %v149, 1
        %v313 = vsel %vm285, %v308, %v312
        %v314 = vrot.slane %v150, 1
        %v315 = vsel %vm285, %v310, %v314
        %v334 = vrot.slane %v170, 1
        %v335 = vrot.slane %v171, 1
        %v338 = vsel %vm285, %v312, %v334
        %v339 = vsel %vm285, %v314, %v335
        %vm340 = vcmask 1045504
        %v341 = vrot.slane %v137, 2
        %v342 = vsel %vm340, %v153, %v341
        %v343 = vrot.slane %v138, 2
        %v344 = vsel %vm340, %v154, %v343
        %v345 = vrot.slane %v139, 2
        %v346 = vsel %vm340, %v341, %v345
        %v347 = vrot.slane %v140, 2
        %v348 = vsel %vm340, %v343, %v347
        %v349 = vrot.slane %v141, 2
        %v350 = vsel %vm340, %v345, %v349
        %v351 = vrot.slane %v142, 2
        %v352 = vsel %vm340, %v347, %v351
        %v353 = vrot.slane %v143, 2
        %v354 = vsel %vm340, %v349, %v353
        %v355 = vrot.slane %v144, 2
        %v356 = vsel %vm340, %v351, %v355
        %v357 = vrot.slane %v145, 2
        %v358 = vsel %vm340, %v353, %v357
        %v359 = vrot.slane %v146, 2
        %v360 = vsel %vm340, %v355, %v359
        %v361 = vrot.slane %v147, 2
        %v362 = vsel %vm340, %v357, %v361
        %v363 = vrot.slane %v148, 2
        %v364 = vsel %vm340, %v359, %v363
        %v365 = vrot.slane %v149, 2
        %v366 = vsel %vm340, %v361, %v365
        %v367 = vrot.slane %v150, 2
        %v368 = vsel %vm340, %v363, %v367
        %v385 = vrot.slane %v170, 2
        %v386 = vrot.slane %v171, 2
        %v389 = vsel %vm340, %v365, %v385
        %v390 = vsel %vm340, %v367, %v386
        %v391 = vadd.f32 %v229, %v342
        %v392 = vadd.f32 %v230, %v344
        %v393 = vadd.f32 %v188, %v346
        %v394 = vadd.f32 %v190, %v348
        %v395 = vadd.f32 %v192, %v350
        %v396 = vadd.f32 %v194, %v352
        %v397 = vadd.f32 %v196, %v354
        %v398 = vadd.f32 %v198, %v356
        %v399 = vadd.f32 %v200, %v358
        %v400 = vadd.f32 %v202, %v360
        %v401 = vadd.f32 %v204, %v362
        %v402 = vadd.f32 %v206, %v364
        %v403 = vadd.f32 %v208, %v366
        %v404 = vadd.f32 %v210, %v368
        %v405 = vadd.f32 %v211, %v389
        %v406 = vadd.f32 %v212, %v390
        %v407 = vmul.f32 %v391, 0.0625
        %v408 = vmul.f32 %v392, 0.0625
        %v409 = vmul.f32 %v393, 0.0625
        %v410 = vmul.f32 %v394, 0.0625
        %v411 = vmul.f32 %v395, 0.0625
        %v412 = vmul.f32 %v396, 0.0625
        %v413 = vmul.f32 %v397, 0.0625
        %v414 = vmul.f32 %v398, 0.0625
        %v415 = vmul.f32 %v399, 0.0625
        %v416 = vmul.f32 %v400, 0.0625
        %v417 = vmul.f32 %v401, 0.0625
        %v418 = vmul.f32 %v402, 0.0625
        %v419 = vmul.f32 %v403, 0.0625
        %v420 = vmul.f32 %v404, 0.0625
        %v421 = vmul.f32 %v405, 0.0625
        %v422 = vmul.f32 %v406, 0.0625
        %v423 = vadd.f32 %v283, %v288
        %v424 = vadd.f32 %v284, %v291
        %v425 = vadd.f32 %v240, %v293
        %v426 = vadd.f32 %v242, %v295
        %v427 = vadd.f32 %v244, %v297
        %v428 = vadd.f32 %v246, %v299
        %v429 = vadd.f32 %v248, %v301
        %v430 = vadd.f32 %v250, %v303
        %v431 = vadd.f32 %v252, %v305
        %v432 = vadd.f32 %v254, %v307
        %v433 = vadd.f32 %v256, %v309
        %v434 = vadd.f32 %v258, %v311
        %v435 = vadd.f32 %v260, %v313
        %v436 = vadd.f32 %v262, %v315
        %v437 = vadd.f32 %v264, %v338
        %v438 = vadd.f32 %v266, %v339
        %v439 = vmul.f32 %v423, 0.25
        %v440 = vmul.f32 %v424, 0.25
        %v441 = vmul.f32 %v425, 0.25
        %v442 = vmul.f32 %v426, 0.25
        %v443 = vmul.f32 %v427, 0.25
        %v444 = vmul.f32 %v428, 0.25
        %v445 = vmul.f32 %v429, 0.25
        %v446 = vmul.f32 %v430, 0.25
        %v447 = vmul.f32 %v431, 0.25
        %v448 = vmul.f32 %v432, 0.25
        %v449 = vmul.f32 %v433, 0.25
        %v450 = vmul.f32 %v434, 0.25
        %v451 = vmul.f32 %v435, 0.25
        %v452 = vmul.f32 %v436, 0.25
        %v453 = vmul.f32 %v437, 0.25
        %v454 = vmul.f32 %v438, 0.25
        %v455 = vadd.f32 %v407, %v439
        %v456 = vadd.f32 %v408, %v440
        %v457 = vadd.f32 %v409, %v441
        %v458 = vadd.f32 %v410, %v442
        %v459 = vadd.f32 %v411, %v443
        %v460 = vadd.f32 %v412, %v444
        %v461 = vadd.f32 %v413, %v445
        %v462 = vadd.f32 %v414, %v446
        %v463 = vadd.f32 %v415, %v447
        %v464 = vadd.f32 %v416, %v448
        %v465 = vadd.f32 %v417, %v449
        %v466 = vadd.f32 %v418, %v450
        %v467 = vadd.f32 %v419, %v451
        %v468 = vadd.f32 %v420, %v452
        %v469 = vadd.f32 %v421, %v453
        %v470 = vadd.f32 %v422, %v454
        %v471 = vmul.f32 %v135, 0.375
        %v472 = vmul.f32 %v136, 0.375
        %v473 = vmul.f32 %v137, 0.375
        %v474 = vmul.f32 %v138, 0.375
        %v475 = vmul.f32 %v139, 0.375
        %v476 = vmul.f32 %v140, 0.375
        %v477 = vmul.f32 %v141, 0.375
        %v478 = vmul.f32 %v142, 0.375
        %v479 = vmul.f32 %v143, 0.375
        %v480 = vmul.f32 %v144, 0.375
        %v481 = vmul.f32 %v145, 0.375
        %v482 = vmul.f32 %v146, 0.375
        %v483 = vmul.f32 %v147, 0.375
        %v484 = vmul.f32 %v148, 0.375
        %v485 = vmul.f32 %v149, 0.375
        %v486 = vmul.f32 %v150, 0.375
        %v487 = vadd.f32 %v455, %v471
        %v488 = vadd.f32 %v456, %v472
        %v489 = vadd.f32 %v457, %v473
        %v490 = vadd.f32 %v458, %v474
        %v491 = vadd.f32 %v459, %v475
        %v492 = vadd.f32 %v460, %v476
        %v493 = vadd.f32 %v461, %v477
        %v494 = vadd.f32 %v462, %v478
        %v495 = vadd.f32 %v463, %v479
        %v496 = vadd.f32 %v464, %v480
        %v497 = vadd.f32 %v465, %v481
        %v498 = vadd.f32 %v466, %v482
        %v499 = vadd.f32 %v467, %v483
        %v500 = vadd.f32 %v468, %v484
        %v501 = vadd.f32 %v469, %v485
        %v502 = vadd.f32 %v470, %v486
        %503 = vrot.lane.b32.xlu0 %v487, 1
        %v504 = vpop.permute.xlu0 %503
        %505 = vrot.lane.b32.xlu0 %v489, 1
        %v506 = vpop.permute.xlu0 %505
        %507 = vrot.lane.b32.xlu0 %v491, 1
        %v508 = vpop.permute.xlu0 %507
        %509 = vrot.lane.b32.xlu0 %v493, 1
        %v510 = vpop.permute.xlu0 %509
        %511 = vrot.lane.b32.xlu0 %v495, 1
        %v512 = vpop.permute.xlu0 %511
        %513 = vrot.lane.b32.xlu0 %v497, 1
        %v514 = vpop.permute.xlu0 %513
        %515 = vrot.lane.b32.xlu0 %v499, 1
        %v516 = vpop.permute.xlu0 %515
        %517 = vrot.lane.b32.xlu0 %v501, 1
        %v518 = vpop.permute.xlu0 %517
        %519 = vrot.lane.b32.xlu0 %v488, 1
        %v520 = vpop.permute.xlu0 %519
        %521 = vrot.lane.b32.xlu0 %v490, 1
        %v522 = vpop.permute.xlu0 %521
        %523 = vrot.lane.b32.xlu0 %v492, 1
        %v524 = vpop.permute.xlu0 %523
        %525 = vrot.lane.b32.xlu0 %v494, 1
        %v526 = vpop.permute.xlu0 %525
        %527 = vrot.lane.b32.xlu0 %v496, 1
        %v528 = vpop.permute.xlu0 %527
        %529 = vrot.lane.b32.xlu0 %v498, 1
        %v530 = vpop.permute.xlu0 %529
        %531 = vrot.lane.b32.xlu0 %v500, 1
        %v532 = vpop.permute.xlu0 %531
        %533 = vrot.lane.b32.xlu0 %v502, 1
        %v534 = vpop.permute.xlu0 %533
        %v535 = vlaneseq
        %v536 = vand.u32 %v535, 127
        %vm537 = vcmp.lt.s32.totalorder %v536, 1
        %v538 = vsel %vm537, %v504, %v520
        %v539 = vsel %vm537, %v506, %v522
        %v540 = vsel %vm537, %v508, %v524
        %v541 = vsel %vm537, %v510, %v526
        %v542 = vsel %vm537, %v512, %v528
        %v543 = vsel %vm537, %v514, %v530
        %v544 = vsel %vm537, %v516, %v532
        %v545 = vsel %vm537, %v518, %v534
        %v546 = vsel %vm537, %v520, %v504
        %v547 = vsel %vm537, %v522, %v506
        %v548 = vsel %vm537, %v524, %v508
        %v549 = vsel %vm537, %v526, %v510
        %v550 = vsel %vm537, %v528, %v512
        %v551 = vsel %vm537, %v530, %v514
        %v552 = vsel %vm537, %v532, %v516
        %v553 = vsel %vm537, %v534, %v518
        %554 = vrot.lane.b32.xlu0 %v487, 2
        %v555 = vpop.permute.xlu0 %554
        %556 = vrot.lane.b32.xlu0 %v489, 2
        %v557 = vpop.permute.xlu0 %556
        %558 = vrot.lane.b32.xlu0 %v491, 2
        %v559 = vpop.permute.xlu0 %558
        %560 = vrot.lane.b32.xlu0 %v493, 2
        %v561 = vpop.permute.xlu0 %560
        %562 = vrot.lane.b32.xlu0 %v495, 2
        %v563 = vpop.permute.xlu0 %562
        %564 = vrot.lane.b32.xlu0 %v497, 2
        %v565 = vpop.permute.xlu0 %564
        %566 = vrot.lane.b32.xlu0 %v499, 2
        %v567 = vpop.permute.xlu0 %566
        %568 = vrot.lane.b32.xlu0 %v501, 2
        %v569 = vpop.permute.xlu0 %568
        %570 = vrot.lane.b32.xlu0 %v488, 2
        %v571 = vpop.permute.xlu0 %570
        %572 = vrot.lane.b32.xlu0 %v490, 2
        %v573 = vpop.permute.xlu0 %572
        %574 = vrot.lane.b32.xlu0 %v492, 2
        %v575 = vpop.permute.xlu0 %574
        %576 = vrot.lane.b32.xlu0 %v494, 2
        %v577 = vpop.permute.xlu0 %576
        %578 = vrot.lane.b32.xlu0 %v496, 2
        %v579 = vpop.permute.xlu0 %578
        %580 = vrot.lane.b32.xlu0 %v498, 2
        %v581 = vpop.permute.xlu0 %580
        %582 = vrot.lane.b32.xlu0 %v500, 2
        %v583 = vpop.permute.xlu0 %582
        %584 = vrot.lane.b32.xlu0 %v502, 2
        %v585 = vpop.permute.xlu0 %584
        %vm586 = vcmp.lt.s32.totalorder %v536, 2
        %v587 = vsel %vm586, %v555, %v571
        %v588 = vsel %vm586, %v557, %v573
        %v589 = vsel %vm586, %v559, %v575
        %v590 = vsel %vm586, %v561, %v577
        %v591 = vsel %vm586, %v563, %v579
        %v592 = vsel %vm586, %v565, %v581
        %v593 = vsel %vm586, %v567, %v583
        %v594 = vsel %vm586, %v569, %v585
        %v595 = vsel %vm586, %v571, %v555
        %v596 = vsel %vm586, %v573, %v557
        %v597 = vsel %vm586, %v575, %v559
        %v598 = vsel %vm586, %v577, %v561
        %v599 = vsel %vm586, %v579, %v563
        %v600 = vsel %vm586, %v581, %v565
        %v601 = vsel %vm586, %v583, %v567
        %v602 = vsel %vm586, %v585, %v569
        %603 = vrot.lane.b32.xlu0 %v487, 127
        %v604 = vpop.permute.xlu0 %603
        %605 = vrot.lane.b32.xlu0 %v489, 127
        %v606 = vpop.permute.xlu0 %605
        %607 = vrot.lane.b32.xlu0 %v491, 127
        %v608 = vpop.permute.xlu0 %607
        %609 = vrot.lane.b32.xlu0 %v493, 127
        %v610 = vpop.permute.xlu0 %609
        %611 = vrot.lane.b32.xlu0 %v495, 127
        %v612 = vpop.permute.xlu0 %611
        %613 = vrot.lane.b32.xlu0 %v497, 127
        %v614 = vpop.permute.xlu0 %613
        %615 = vrot.lane.b32.xlu0 %v499, 127
        %v616 = vpop.permute.xlu0 %615
        %617 = vrot.lane.b32.xlu0 %v501, 127
        %v618 = vpop.permute.xlu0 %617
        %619 = vrot.lane.b32.xlu0 %v488, 127
        %v620 = vpop.permute.xlu0 %619
        %621 = vrot.lane.b32.xlu0 %v490, 127
        %v622 = vpop.permute.xlu0 %621
        %623 = vrot.lane.b32.xlu0 %v492, 127
        %v624 = vpop.permute.xlu0 %623
        %625 = vrot.lane.b32.xlu0 %v494, 127
        %v626 = vpop.permute.xlu0 %625
        %627 = vrot.lane.b32.xlu0 %v496, 127
        %v628 = vpop.permute.xlu0 %627
        %629 = vrot.lane.b32.xlu0 %v498, 127
        %v630 = vpop.permute.xlu0 %629
        %631 = vrot.lane.b32.xlu0 %v500, 127
        %v632 = vpop.permute.xlu0 %631
        %633 = vrot.lane.b32.xlu0 %v502, 127
        %v634 = vpop.permute.xlu0 %633
        %vm635 = vcmp.lt.s32.totalorder %v536, 127
        %v636 = vsel %vm635, %v604, %v620
        %v637 = vsel %vm635, %v606, %v622
        %v638 = vsel %vm635, %v608, %v624
        %v639 = vsel %vm635, %v610, %v626
        %v640 = vsel %vm635, %v612, %v628
        %v641 = vsel %vm635, %v614, %v630
        %v642 = vsel %vm635, %v616, %v632
        %v643 = vsel %vm635, %v618, %v634
        %v644 = vsel %vm635, %v620, %v604
        %v645 = vsel %vm635, %v622, %v606
        %v646 = vsel %vm635, %v624, %v608
        %v647 = vsel %vm635, %v626, %v610
        %v648 = vsel %vm635, %v628, %v612
        %v649 = vsel %vm635, %v630, %v614
        %v650 = vsel %vm635, %v632, %v616
        %v651 = vsel %vm635, %v634, %v618
        %652 = vrot.lane.b32.xlu0 %v487, 126
        %v653 = vpop.permute.xlu0 %652
        %654 = vrot.lane.b32.xlu0 %v489, 126
        %v655 = vpop.permute.xlu0 %654
        %656 = vrot.lane.b32.xlu0 %v491, 126
        %v657 = vpop.permute.xlu0 %656
        %658 = vrot.lane.b32.xlu0 %v493, 126
        %v659 = vpop.permute.xlu0 %658
        %660 = vrot.lane.b32.xlu0 %v495, 126
        %v661 = vpop.permute.xlu0 %660
        %662 = vrot.lane.b32.xlu0 %v497, 126
        %v663 = vpop.permute.xlu0 %662
        %664 = vrot.lane.b32.xlu0 %v499, 126
        %v665 = vpop.permute.xlu0 %664
        %666 = vrot.lane.b32.xlu0 %v501, 126
        %v667 = vpop.permute.xlu0 %666
        %668 = vrot.lane.b32.xlu0 %v488, 126
        %v669 = vpop.permute.xlu0 %668
        %670 = vrot.lane.b32.xlu0 %v490, 126
        %v671 = vpop.permute.xlu0 %670
        %672 = vrot.lane.b32.xlu0 %v492, 126
        %v673 = vpop.permute.xlu0 %672
        %674 = vrot.lane.b32.xlu0 %v494, 126
        %v675 = vpop.permute.xlu0 %674
        %676 = vrot.lane.b32.xlu0 %v496, 126
        %v677 = vpop.permute.xlu0 %676
        %678 = vrot.lane.b32.xlu0 %v498, 126
        %v679 = vpop.permute.xlu0 %678
        %680 = vrot.lane.b32.xlu0 %v500, 126
        %v681 = vpop.permute.xlu0 %680
        %682 = vrot.lane.b32.xlu0 %v502, 126
        %v683 = vpop.permute.xlu0 %682
        %vm684 = vcmp.lt.s32.totalorder %v536, 126
        %v685 = vsel %vm684, %v653, %v669
        %v686 = vsel %vm684, %v655, %v671
        %v687 = vsel %vm684, %v657, %v673
        %v688 = vsel %vm684, %v659, %v675
        %v689 = vsel %vm684, %v661, %v677
        %v690 = vsel %vm684, %v663, %v679
        %v691 = vsel %vm684, %v665, %v681
        %v692 = vsel %vm684, %v667, %v683
        %v693 = vsel %vm684, %v669, %v653
        %v694 = vsel %vm684, %v671, %v655
        %v695 = vsel %vm684, %v673, %v657
        %v696 = vsel %vm684, %v675, %v659
        %v697 = vsel %vm684, %v677, %v661
        %v698 = vsel %vm684, %v679, %v663
        %v699 = vsel %vm684, %v681, %v665
        %v700 = vsel %vm684, %v683, %v667
        %v701 = vadd.f32 %v595, %v685
        %v702 = vadd.f32 %v587, %v693
        %v703 = vadd.f32 %v596, %v686
        %v704 = vadd.f32 %v588, %v694
        %v705 = vadd.f32 %v597, %v687
        %v706 = vadd.f32 %v589, %v695
        %v707 = vadd.f32 %v598, %v688
        %v708 = vadd.f32 %v590, %v696
        %v709 = vadd.f32 %v599, %v689
        %v710 = vadd.f32 %v591, %v697
        %v711 = vadd.f32 %v600, %v690
        %v712 = vadd.f32 %v592, %v698
        %v713 = vadd.f32 %v601, %v691
        %v714 = vadd.f32 %v593, %v699
        %v715 = vadd.f32 %v602, %v692
        %v716 = vadd.f32 %v594, %v700
        %v717 = vmul.f32 %v701, 0.0625
        %v718 = vmul.f32 %v702, 0.0625
        %v719 = vmul.f32 %v703, 0.0625
        %v720 = vmul.f32 %v704, 0.0625
        %v721 = vmul.f32 %v705, 0.0625
        %v722 = vmul.f32 %v706, 0.0625
        %v723 = vmul.f32 %v707, 0.0625
        %v724 = vmul.f32 %v708, 0.0625
        %v725 = vmul.f32 %v709, 0.0625
        %v726 = vmul.f32 %v710, 0.0625
        %v727 = vmul.f32 %v711, 0.0625
        %v728 = vmul.f32 %v712, 0.0625
        %v729 = vmul.f32 %v713, 0.0625
        %v730 = vmul.f32 %v714, 0.0625
        %v731 = vmul.f32 %v715, 0.0625
        %v732 = vmul.f32 %v716, 0.0625
        %v733 = vadd.f32 %v546, %v636
        %v734 = vadd.f32 %v538, %v644
        %v735 = vadd.f32 %v547, %v637
        %v736 = vadd.f32 %v539, %v645
        %v737 = vadd.f32 %v548, %v638
        %v738 = vadd.f32 %v540, %v646
        %v739 = vadd.f32 %v549, %v639
        %v740 = vadd.f32 %v541, %v647
        %v741 = vadd.f32 %v550, %v640
        %v742 = vadd.f32 %v542, %v648
        %v743 = vadd.f32 %v551, %v641
        %v744 = vadd.f32 %v543, %v649
        %v745 = vadd.f32 %v552, %v642
        %v746 = vadd.f32 %v544, %v650
        %v747 = vadd.f32 %v553, %v643
        %v748 = vadd.f32 %v545, %v651
        %v749 = vmul.f32 %v733, 0.25
        %v750 = vmul.f32 %v734, 0.25
        %v751 = vmul.f32 %v735, 0.25
        %v752 = vmul.f32 %v736, 0.25
        %v753 = vmul.f32 %v737, 0.25
        %v754 = vmul.f32 %v738, 0.25
        %v755 = vmul.f32 %v739, 0.25
        %v756 = vmul.f32 %v740, 0.25
        %v757 = vmul.f32 %v741, 0.25
        %v758 = vmul.f32 %v742, 0.25
        %v759 = vmul.f32 %v743, 0.25
        %v760 = vmul.f32 %v744, 0.25
        %v761 = vmul.f32 %v745, 0.25
        %v762 = vmul.f32 %v746, 0.25
        %v763 = vmul.f32 %v747, 0.25
        %v764 = vmul.f32 %v748, 0.25
        %v765 = vadd.f32 %v717, %v749
        %v766 = vadd.f32 %v718, %v750
        %v767 = vadd.f32 %v719, %v751
        %v768 = vadd.f32 %v720, %v752
        %v769 = vadd.f32 %v721, %v753
        %v770 = vadd.f32 %v722, %v754
        %v771 = vadd.f32 %v723, %v755
        %v772 = vadd.f32 %v724, %v756
        %v773 = vadd.f32 %v725, %v757
        %v774 = vadd.f32 %v726, %v758
        %v775 = vadd.f32 %v727, %v759
        %v776 = vadd.f32 %v728, %v760
        %v777 = vadd.f32 %v729, %v761
        %v778 = vadd.f32 %v730, %v762
        %v779 = vadd.f32 %v731, %v763
        %v780 = vadd.f32 %v732, %v764
        %v781 = vmul.f32 %v487, 0.375
        %v782 = vmul.f32 %v488, 0.375
        %v783 = vmul.f32 %v489, 0.375
        %v784 = vmul.f32 %v490, 0.375
        %v785 = vmul.f32 %v491, 0.375
        %v786 = vmul.f32 %v492, 0.375
        %v787 = vmul.f32 %v493, 0.375
        %v788 = vmul.f32 %v494, 0.375
        %v789 = vmul.f32 %v495, 0.375
        %v790 = vmul.f32 %v496, 0.375
        %v791 = vmul.f32 %v497, 0.375
        %v792 = vmul.f32 %v498, 0.375
        %v793 = vmul.f32 %v499, 0.375
        %v794 = vmul.f32 %v500, 0.375
        %v795 = vmul.f32 %v501, 0.375
        %v796 = vmul.f32 %v502, 0.375
        %v797 = vadd.f32 %v765, %v781
        %v798 = vadd.f32 %v766, %v782
        %v799 = vadd.f32 %v767, %v783
        %v800 = vadd.f32 %v768, %v784
        %v801 = vadd.f32 %v769, %v785
        %v802 = vadd.f32 %v770, %v786
        %v803 = vadd.f32 %v771, %v787
        %v804 = vadd.f32 %v772, %v788
        %v805 = vadd.f32 %v773, %v789
        %v806 = vadd.f32 %v774, %v790
        %v807 = vadd.f32 %v775, %v791
        %v808 = vadd.f32 %v776, %v792
        %v809 = vadd.f32 %v777, %v793
        %v810 = vadd.f32 %v778, %v794
        %v811 = vadd.f32 %v779, %v795
        %v812 = vadd.f32 %v780, %v796
        %813 = vst [vmem:[%s134] sm:$0xff] %v797
        %814 = vst [vmem:[%s134 + $0x8] sm:$0xff] %v798
        %815 = vst [vmem:[%s134 + $0x10] sm:$0xff] %v799
        %816 = vst [vmem:[%s134 + $0x18] sm:$0xff] %v800
        %817 = vst [vmem:[%s134 + $0x20] sm:$0xff] %v801
        %818 = vst [vmem:[%s134 + $0x28] sm:$0xff] %v802
        %819 = vst [vmem:[%s134 + $0x30] sm:$0xff] %v803
        %820 = vst [vmem:[%s134 + $0x38] sm:$0xff] %v804
        %821 = vst [vmem:[%s134 + $0x40] sm:$0xff] %v805
        %822 = vst [vmem:[%s134 + $0x48] sm:$0xff] %v806
        %823 = vst [vmem:[%s134 + $0x50] sm:$0xff] %v807
        %824 = vst [vmem:[%s134 + $0x58] sm:$0xff] %v808
        %825 = vst [vmem:[%s134 + $0x60] sm:$0xff] %v809
        %826 = vst [vmem:[%s134 + $0x68] sm:$0xff] %v810
        %827 = vst [vmem:[%s134 + $0x70] sm:$0xff] %v811
        %828 = vst [vmem:[%s134 + $0x78] sm:$0xff] %v812
        %v829 = vmul.f32 %v487, 0.5
        %v830 = vmul.f32 %v489, 0.5
        %v831 = vmul.f32 %v491, 0.5
        %v832 = vmul.f32 %v493, 0.5
        %v833 = vmul.f32 %v495, 0.5
        %v834 = vmul.f32 %v497, 0.5
        %v835 = vmul.f32 %v499, 0.5
        %v836 = vmul.f32 %v501, 0.5
        %845 = vrot.lane.b32.xlu0 %v829, 127
        %v846 = vpop.permute.xlu0 %845
        %847 = vrot.lane.b32.xlu0 %v830, 127
        %v848 = vpop.permute.xlu0 %847
        %849 = vrot.lane.b32.xlu0 %v831, 127
        %v850 = vpop.permute.xlu0 %849
        %851 = vrot.lane.b32.xlu0 %v832, 127
        %v852 = vpop.permute.xlu0 %851
        %853 = vrot.lane.b32.xlu0 %v833, 127
        %v854 = vpop.permute.xlu0 %853
        %855 = vrot.lane.b32.xlu0 %v834, 127
        %v856 = vpop.permute.xlu0 %855
        %857 = vrot.lane.b32.xlu0 %v835, 127
        %v858 = vpop.permute.xlu0 %857
        %859 = vrot.lane.b32.xlu0 %v836, 127
        %v860 = vpop.permute.xlu0 %859
        %v869 = vadd.f32 %v781, %v846
        %v870 = vadd.f32 %v783, %v848
        %v871 = vadd.f32 %v785, %v850
        %v872 = vadd.f32 %v787, %v852
        %v873 = vadd.f32 %v789, %v854
        %v874 = vadd.f32 %v791, %v856
        %v875 = vadd.f32 %v793, %v858
        %v876 = vadd.f32 %v795, %v860
        %v877 = vmul.f32 %v487, 0.125
        %v878 = vmul.f32 %v489, 0.125
        %v879 = vmul.f32 %v491, 0.125
        %v880 = vmul.f32 %v493, 0.125
        %v881 = vmul.f32 %v495, 0.125
        %v882 = vmul.f32 %v497, 0.125
        %v883 = vmul.f32 %v499, 0.125
        %v884 = vmul.f32 %v501, 0.125
        %893 = vrot.lane.b32.xlu0 %v877, 126
        %v894 = vpop.permute.xlu0 %893
        %895 = vrot.lane.b32.xlu0 %v878, 126
        %v896 = vpop.permute.xlu0 %895
        %897 = vrot.lane.b32.xlu0 %v879, 126
        %v898 = vpop.permute.xlu0 %897
        %899 = vrot.lane.b32.xlu0 %v880, 126
        %v900 = vpop.permute.xlu0 %899
        %901 = vrot.lane.b32.xlu0 %v881, 126
        %v902 = vpop.permute.xlu0 %901
        %903 = vrot.lane.b32.xlu0 %v882, 126
        %v904 = vpop.permute.xlu0 %903
        %905 = vrot.lane.b32.xlu0 %v883, 126
        %v906 = vpop.permute.xlu0 %905
        %907 = vrot.lane.b32.xlu0 %v884, 126
        %v908 = vpop.permute.xlu0 %907
        %v917 = vadd.f32 %v869, %v894
        %v918 = vadd.f32 %v870, %v896
        %v919 = vadd.f32 %v871, %v898
        %v920 = vadd.f32 %v872, %v900
        %v921 = vadd.f32 %v873, %v902
        %v922 = vadd.f32 %v874, %v904
        %v923 = vadd.f32 %v875, %v906
        %v924 = vadd.f32 %v876, %v908
        %vm925 = vcmask 7168
        %926 = vst.msk [vmem:[%s134] sm:$0xff] %vm925, %v917
        %927 = vst.msk [vmem:[%s134 + $0x10] sm:$0xff] %vm925, %v918
        %928 = vst.msk [vmem:[%s134 + $0x20] sm:$0xff] %vm925, %v919
        %929 = vst.msk [vmem:[%s134 + $0x30] sm:$0xff] %vm925, %v920
        %930 = vst.msk [vmem:[%s134 + $0x40] sm:$0xff] %vm925, %v921
        %931 = vst.msk [vmem:[%s134 + $0x50] sm:$0xff] %vm925, %v922
        %932 = vst.msk [vmem:[%s134 + $0x60] sm:$0xff] %vm925, %v923
        %933 = vst.msk [vmem:[%s134 + $0x70] sm:$0xff] %vm925, %v924
        %v934 = vmul.f32 %v487, 0.25
        %v935 = vmul.f32 %v489, 0.25
        %v936 = vmul.f32 %v491, 0.25
        %v937 = vmul.f32 %v493, 0.25
        %v938 = vmul.f32 %v495, 0.25
        %v939 = vmul.f32 %v497, 0.25
        %v940 = vmul.f32 %v499, 0.25
        %v941 = vmul.f32 %v501, 0.25
        %v942 = vmul.f32 %v487, 0.4375
        %v943 = vmul.f32 %v489, 0.4375
        %v944 = vmul.f32 %v491, 0.4375
        %v945 = vmul.f32 %v493, 0.4375
        %v946 = vmul.f32 %v495, 0.4375
        %v947 = vmul.f32 %v497, 0.4375
        %v948 = vmul.f32 %v499, 0.4375
        %v949 = vmul.f32 %v501, 0.4375
        %958 = vrot.lane.b32.xlu0 %v942, 127
        %v959 = vpop.permute.xlu0 %958
        %960 = vrot.lane.b32.xlu0 %v943, 127
        %v961 = vpop.permute.xlu0 %960
        %962 = vrot.lane.b32.xlu0 %v944, 127
        %v963 = vpop.permute.xlu0 %962
        %964 = vrot.lane.b32.xlu0 %v945, 127
        %v965 = vpop.permute.xlu0 %964
        %966 = vrot.lane.b32.xlu0 %v946, 127
        %v967 = vpop.permute.xlu0 %966
        %968 = vrot.lane.b32.xlu0 %v947, 127
        %v969 = vpop.permute.xlu0 %968
        %970 = vrot.lane.b32.xlu0 %v948, 127
        %v971 = vpop.permute.xlu0 %970
        %972 = vrot.lane.b32.xlu0 %v949, 127
        %v973 = vpop.permute.xlu0 %972
        %v982 = vadd.f32 %v934, %v959
        %v983 = vadd.f32 %v935, %v961
        %v984 = vadd.f32 %v936, %v963
        %v985 = vadd.f32 %v937, %v965
        %v986 = vadd.f32 %v938, %v967
        %v987 = vadd.f32 %v939, %v969
        %v988 = vadd.f32 %v940, %v971
        %v989 = vadd.f32 %v941, %v973
        %998 = vrot.lane.b32.xlu0 %v934, 126
        %v999 = vpop.permute.xlu0 %998
        %1000 = vrot.lane.b32.xlu0 %v935, 126
        %v1001 = vpop.permute.xlu0 %1000
        %1002 = vrot.lane.b32.xlu0 %v936, 126
        %v1003 = vpop.permute.xlu0 %1002
        %1004 = vrot.lane.b32.xlu0 %v937, 126
        %v1005 = vpop.permute.xlu0 %1004
        %1006 = vrot.lane.b32.xlu0 %v938, 126
        %v1007 = vpop.permute.xlu0 %1006
        %1008 = vrot.lane.b32.xlu0 %v939, 126
        %v1009 = vpop.permute.xlu0 %1008
        %1010 = vrot.lane.b32.xlu0 %v940, 126
        %v1011 = vpop.permute.xlu0 %1010
        %1012 = vrot.lane.b32.xlu0 %v941, 126
        %v1013 = vpop.permute.xlu0 %1012
        %v1022 = vadd.f32 %v982, %v999
        %v1023 = vadd.f32 %v983, %v1001
        %v1024 = vadd.f32 %v984, %v1003
        %v1025 = vadd.f32 %v985, %v1005
        %v1026 = vadd.f32 %v986, %v1007
        %v1027 = vadd.f32 %v987, %v1009
        %v1028 = vadd.f32 %v988, %v1011
        %v1029 = vadd.f32 %v989, %v1013
        %v1030 = vmul.f32 %v487, 0.0625
        %v1031 = vmul.f32 %v489, 0.0625
        %v1032 = vmul.f32 %v491, 0.0625
        %v1033 = vmul.f32 %v493, 0.0625
        %v1034 = vmul.f32 %v495, 0.0625
        %v1035 = vmul.f32 %v497, 0.0625
        %v1036 = vmul.f32 %v499, 0.0625
        %v1037 = vmul.f32 %v501, 0.0625
        %1046 = vrot.lane.b32.xlu0 %v1030, 125
        %v1047 = vpop.permute.xlu0 %1046
        %1048 = vrot.lane.b32.xlu0 %v1031, 125
        %v1049 = vpop.permute.xlu0 %1048
        %1050 = vrot.lane.b32.xlu0 %v1032, 125
        %v1051 = vpop.permute.xlu0 %1050
        %1052 = vrot.lane.b32.xlu0 %v1033, 125
        %v1053 = vpop.permute.xlu0 %1052
        %1054 = vrot.lane.b32.xlu0 %v1034, 125
        %v1055 = vpop.permute.xlu0 %1054
        %1056 = vrot.lane.b32.xlu0 %v1035, 125
        %v1057 = vpop.permute.xlu0 %1056
        %1058 = vrot.lane.b32.xlu0 %v1036, 125
        %v1059 = vpop.permute.xlu0 %1058
        %1060 = vrot.lane.b32.xlu0 %v1037, 125
        %v1061 = vpop.permute.xlu0 %1060
        %v1070 = vadd.f32 %v1022, %v1047
        %v1071 = vadd.f32 %v1023, %v1049
        %v1072 = vadd.f32 %v1024, %v1051
        %v1073 = vadd.f32 %v1025, %v1053
        %v1074 = vadd.f32 %v1026, %v1055
        %v1075 = vadd.f32 %v1027, %v1057
        %v1076 = vadd.f32 %v1028, %v1059
        %v1077 = vadd.f32 %v1029, %v1061
        %1086 = vrot.lane.b32.xlu0 %v1070, 1
        %v1087 = vpop.permute.xlu0 %1086
        %1088 = vrot.lane.b32.xlu0 %v1071, 1
        %v1089 = vpop.permute.xlu0 %1088
        %1090 = vrot.lane.b32.xlu0 %v1072, 1
        %v1091 = vpop.permute.xlu0 %1090
        %1092 = vrot.lane.b32.xlu0 %v1073, 1
        %v1093 = vpop.permute.xlu0 %1092
        %1094 = vrot.lane.b32.xlu0 %v1074, 1
        %v1095 = vpop.permute.xlu0 %1094
        %1096 = vrot.lane.b32.xlu0 %v1075, 1
        %v1097 = vpop.permute.xlu0 %1096
        %1098 = vrot.lane.b32.xlu0 %v1076, 1
        %v1099 = vpop.permute.xlu0 %1098
        %1100 = vrot.lane.b32.xlu0 %v1077, 1
        %v1101 = vpop.permute.xlu0 %1100
        %vm1110 = vcmask 15368
        %1111 = vst.msk [vmem:[%s134] sm:$0xff] %vm1110, %v1087
        %1112 = vst.msk [vmem:[%s134 + $0x10] sm:$0xff] %vm1110, %v1089
        %1113 = vst.msk [vmem:[%s134 + $0x20] sm:$0xff] %vm1110, %v1091
        %1114 = vst.msk [vmem:[%s134 + $0x30] sm:$0xff] %vm1110, %v1093
        %1115 = vst.msk [vmem:[%s134 + $0x40] sm:$0xff] %vm1110, %v1095
        %1116 = vst.msk [vmem:[%s134 + $0x50] sm:$0xff] %vm1110, %v1097
        %1117 = vst.msk [vmem:[%s134 + $0x60] sm:$0xff] %vm1110, %v1099
        %1118 = vst.msk [vmem:[%s134 + $0x70] sm:$0xff] %vm1110, %v1101
        %v1119 = vmul.f32 %v488, 0.0625
        %v1120 = vmul.f32 %v490, 0.0625
        %v1121 = vmul.f32 %v492, 0.0625
        %v1122 = vmul.f32 %v494, 0.0625
        %v1123 = vmul.f32 %v496, 0.0625
        %v1124 = vmul.f32 %v498, 0.0625
        %v1125 = vmul.f32 %v500, 0.0625
        %v1126 = vmul.f32 %v502, 0.0625
        %v1127 = vmul.f32 %v488, 0.25
        %v1128 = vmul.f32 %v490, 0.25
        %v1129 = vmul.f32 %v492, 0.25
        %v1130 = vmul.f32 %v494, 0.25
        %v1131 = vmul.f32 %v496, 0.25
        %v1132 = vmul.f32 %v498, 0.25
        %v1133 = vmul.f32 %v500, 0.25
        %v1134 = vmul.f32 %v502, 0.25
        %1143 = vrot.lane.b32.xlu0 %v1127, 127
        %v1144 = vpop.permute.xlu0 %1143
        %1145 = vrot.lane.b32.xlu0 %v1128, 127
        %v1146 = vpop.permute.xlu0 %1145
        %1147 = vrot.lane.b32.xlu0 %v1129, 127
        %v1148 = vpop.permute.xlu0 %1147
        %1149 = vrot.lane.b32.xlu0 %v1130, 127
        %v1150 = vpop.permute.xlu0 %1149
        %1151 = vrot.lane.b32.xlu0 %v1131, 127
        %v1152 = vpop.permute.xlu0 %1151
        %1153 = vrot.lane.b32.xlu0 %v1132, 127
        %v1154 = vpop.permute.xlu0 %1153
        %1155 = vrot.lane.b32.xlu0 %v1133, 127
        %v1156 = vpop.permute.xlu0 %1155
        %1157 = vrot.lane.b32.xlu0 %v1134, 127
        %v1158 = vpop.permute.xlu0 %1157
        %v1167 = vadd.f32 %v1119, %v1144
        %v1168 = vadd.f32 %v1120, %v1146
        %v1169 = vadd.f32 %v1121, %v1148
        %v1170 = vadd.f32 %v1122, %v1150
        %v1171 = vadd.f32 %v1123, %v1152
        %v1172 = vadd.f32 %v1124, %v1154
        %v1173 = vadd.f32 %v1125, %v1156
        %v1174 = vadd.f32 %v1126, %v1158
        %v1175 = vmul.f32 %v488, 0.4375
        %v1176 = vmul.f32 %v490, 0.4375
        %v1177 = vmul.f32 %v492, 0.4375
        %v1178 = vmul.f32 %v494, 0.4375
        %v1179 = vmul.f32 %v496, 0.4375
        %v1180 = vmul.f32 %v498, 0.4375
        %v1181 = vmul.f32 %v500, 0.4375
        %v1182 = vmul.f32 %v502, 0.4375
        %1191 = vrot.lane.b32.xlu0 %v1175, 126
        %v1192 = vpop.permute.xlu0 %1191
        %1193 = vrot.lane.b32.xlu0 %v1176, 126
        %v1194 = vpop.permute.xlu0 %1193
        %1195 = vrot.lane.b32.xlu0 %v1177, 126
        %v1196 = vpop.permute.xlu0 %1195
        %1197 = vrot.lane.b32.xlu0 %v1178, 126
        %v1198 = vpop.permute.xlu0 %1197
        %1199 = vrot.lane.b32.xlu0 %v1179, 126
        %v1200 = vpop.permute.xlu0 %1199
        %1201 = vrot.lane.b32.xlu0 %v1180, 126
        %v1202 = vpop.permute.xlu0 %1201
        %1203 = vrot.lane.b32.xlu0 %v1181, 126
        %v1204 = vpop.permute.xlu0 %1203
        %1205 = vrot.lane.b32.xlu0 %v1182, 126
        %v1206 = vpop.permute.xlu0 %1205
        %v1215 = vadd.f32 %v1167, %v1192
        %v1216 = vadd.f32 %v1168, %v1194
        %v1217 = vadd.f32 %v1169, %v1196
        %v1218 = vadd.f32 %v1170, %v1198
        %v1219 = vadd.f32 %v1171, %v1200
        %v1220 = vadd.f32 %v1172, %v1202
        %v1221 = vadd.f32 %v1173, %v1204
        %v1222 = vadd.f32 %v1174, %v1206
        %1223 = vrot.lane.b32.xlu0 %v1127, 125
        %v1224 = vpop.permute.xlu0 %1223
        %1225 = vrot.lane.b32.xlu0 %v1128, 125
        %v1226 = vpop.permute.xlu0 %1225
        %1227 = vrot.lane.b32.xlu0 %v1129, 125
        %v1228 = vpop.permute.xlu0 %1227
        %1229 = vrot.lane.b32.xlu0 %v1130, 125
        %v1230 = vpop.permute.xlu0 %1229
        %1231 = vrot.lane.b32.xlu0 %v1131, 125
        %v1232 = vpop.permute.xlu0 %1231
        %1233 = vrot.lane.b32.xlu0 %v1132, 125
        %v1234 = vpop.permute.xlu0 %1233
        %1235 = vrot.lane.b32.xlu0 %v1133, 125
        %v1236 = vpop.permute.xlu0 %1235
        %1237 = vrot.lane.b32.xlu0 %v1134, 125
        %v1238 = vpop.permute.xlu0 %1237
        %v1247 = vadd.f32 %v1215, %v1224
        %v1248 = vadd.f32 %v1216, %v1226
        %v1249 = vadd.f32 %v1217, %v1228
        %v1250 = vadd.f32 %v1218, %v1230
        %v1251 = vadd.f32 %v1219, %v1232
        %v1252 = vadd.f32 %v1220, %v1234
        %v1253 = vadd.f32 %v1221, %v1236
        %v1254 = vadd.f32 %v1222, %v1238
        %1263 = vrot.lane.b32.xlu0 %v1247, 2
        %v1264 = vpop.permute.xlu0 %1263
        %1265 = vrot.lane.b32.xlu0 %v1248, 2
        %v1266 = vpop.permute.xlu0 %1265
        %1267 = vrot.lane.b32.xlu0 %v1249, 2
        %v1268 = vpop.permute.xlu0 %1267
        %1269 = vrot.lane.b32.xlu0 %v1250, 2
        %v1270 = vpop.permute.xlu0 %1269
        %1271 = vrot.lane.b32.xlu0 %v1251, 2
        %v1272 = vpop.permute.xlu0 %1271
        %1273 = vrot.lane.b32.xlu0 %v1252, 2
        %v1274 = vpop.permute.xlu0 %1273
        %1275 = vrot.lane.b32.xlu0 %v1253, 2
        %v1276 = vpop.permute.xlu0 %1275
        %1277 = vrot.lane.b32.xlu0 %v1254, 2
        %v1278 = vpop.permute.xlu0 %1277
        %vm1287 = vcmask 1040368
        %1288 = vst.msk [vmem:[%s134 + $0x8] sm:$0xff] %vm1287, %v1264
        %1289 = vst.msk [vmem:[%s134 + $0x18] sm:$0xff] %vm1287, %v1266
        %1290 = vst.msk [vmem:[%s134 + $0x28] sm:$0xff] %vm1287, %v1268
        %1291 = vst.msk [vmem:[%s134 + $0x38] sm:$0xff] %vm1287, %v1270
        %1292 = vst.msk [vmem:[%s134 + $0x48] sm:$0xff] %vm1287, %v1272
        %1293 = vst.msk [vmem:[%s134 + $0x58] sm:$0xff] %vm1287, %v1274
        %1294 = vst.msk [vmem:[%s134 + $0x68] sm:$0xff] %vm1287, %v1276
        %1295 = vst.msk [vmem:[%s134 + $0x78] sm:$0xff] %vm1287, %v1278
        %v1296 = vmul.f32 %v488, 0.125
        %v1297 = vmul.f32 %v490, 0.125
        %v1298 = vmul.f32 %v492, 0.125
        %v1299 = vmul.f32 %v494, 0.125
        %v1300 = vmul.f32 %v496, 0.125
        %v1301 = vmul.f32 %v498, 0.125
        %v1302 = vmul.f32 %v500, 0.125
        %v1303 = vmul.f32 %v502, 0.125
        %v1304 = vmul.f32 %v488, 0.5
        %v1305 = vmul.f32 %v490, 0.5
        %v1306 = vmul.f32 %v492, 0.5
        %v1307 = vmul.f32 %v494, 0.5
        %v1308 = vmul.f32 %v496, 0.5
        %v1309 = vmul.f32 %v498, 0.5
        %v1310 = vmul.f32 %v500, 0.5
        %v1311 = vmul.f32 %v502, 0.5
        %1320 = vrot.lane.b32.xlu0 %v1304, 127
        %v1321 = vpop.permute.xlu0 %1320
        %1322 = vrot.lane.b32.xlu0 %v1305, 127
        %v1323 = vpop.permute.xlu0 %1322
        %1324 = vrot.lane.b32.xlu0 %v1306, 127
        %v1325 = vpop.permute.xlu0 %1324
        %1326 = vrot.lane.b32.xlu0 %v1307, 127
        %v1327 = vpop.permute.xlu0 %1326
        %1328 = vrot.lane.b32.xlu0 %v1308, 127
        %v1329 = vpop.permute.xlu0 %1328
        %1330 = vrot.lane.b32.xlu0 %v1309, 127
        %v1331 = vpop.permute.xlu0 %1330
        %1332 = vrot.lane.b32.xlu0 %v1310, 127
        %v1333 = vpop.permute.xlu0 %1332
        %1334 = vrot.lane.b32.xlu0 %v1311, 127
        %v1335 = vpop.permute.xlu0 %1334
        %v1344 = vadd.f32 %v1296, %v1321
        %v1345 = vadd.f32 %v1297, %v1323
        %v1346 = vadd.f32 %v1298, %v1325
        %v1347 = vadd.f32 %v1299, %v1327
        %v1348 = vadd.f32 %v1300, %v1329
        %v1349 = vadd.f32 %v1301, %v1331
        %v1350 = vadd.f32 %v1302, %v1333
        %v1351 = vadd.f32 %v1303, %v1335
        %1360 = vrot.lane.b32.xlu0 %v782, 126
        %v1361 = vpop.permute.xlu0 %1360
        %1362 = vrot.lane.b32.xlu0 %v784, 126
        %v1363 = vpop.permute.xlu0 %1362
        %1364 = vrot.lane.b32.xlu0 %v786, 126
        %v1365 = vpop.permute.xlu0 %1364
        %1366 = vrot.lane.b32.xlu0 %v788, 126
        %v1367 = vpop.permute.xlu0 %1366
        %1368 = vrot.lane.b32.xlu0 %v790, 126
        %v1369 = vpop.permute.xlu0 %1368
        %1370 = vrot.lane.b32.xlu0 %v792, 126
        %v1371 = vpop.permute.xlu0 %1370
        %1372 = vrot.lane.b32.xlu0 %v794, 126
        %v1373 = vpop.permute.xlu0 %1372
        %1374 = vrot.lane.b32.xlu0 %v796, 126
        %v1375 = vpop.permute.xlu0 %1374
        %v1384 = vadd.f32 %v1344, %v1361
        %v1385 = vadd.f32 %v1345, %v1363
        %v1386 = vadd.f32 %v1346, %v1365
        %v1387 = vadd.f32 %v1347, %v1367
        %v1388 = vadd.f32 %v1348, %v1369
        %v1389 = vadd.f32 %v1349, %v1371
        %v1390 = vadd.f32 %v1350, %v1373
        %v1391 = vadd.f32 %v1351, %v1375
        %1400 = vrot.lane.b32.xlu0 %v1384, 2
        %v1401 = vpop.permute.xlu0 %1400
        %1402 = vrot.lane.b32.xlu0 %v1385, 2
        %v1403 = vpop.permute.xlu0 %1402
        %1404 = vrot.lane.b32.xlu0 %v1386, 2
        %v1405 = vpop.permute.xlu0 %1404
        %1406 = vrot.lane.b32.xlu0 %v1387, 2
        %v1407 = vpop.permute.xlu0 %1406
        %1408 = vrot.lane.b32.xlu0 %v1388, 2
        %v1409 = vpop.permute.xlu0 %1408
        %1410 = vrot.lane.b32.xlu0 %v1389, 2
        %v1411 = vpop.permute.xlu0 %1410
        %1412 = vrot.lane.b32.xlu0 %v1390, 2
        %v1413 = vpop.permute.xlu0 %1412
        %1414 = vrot.lane.b32.xlu0 %v1391, 2
        %v1415 = vpop.permute.xlu0 %1414
        %vm1424 = vcmask 1048568
        %1425 = vst.msk [vmem:[%s134 + $0x8] sm:$0xff] %vm1424, %v1401
        %1426 = vst.msk [vmem:[%s134 + $0x18] sm:$0xff] %vm1424, %v1403
        %1427 = vst.msk [vmem:[%s134 + $0x28] sm:$0xff] %vm1424, %v1405
        %1428 = vst.msk [vmem:[%s134 + $0x38] sm:$0xff] %vm1424, %v1407
        %1429 = vst.msk [vmem:[%s134 + $0x48] sm:$0xff] %vm1424, %v1409
        %1430 = vst.msk [vmem:[%s134 + $0x58] sm:$0xff] %vm1424, %v1411
        %1431 = vst.msk [vmem:[%s134 + $0x68] sm:$0xff] %vm1424, %v1413
        %1432 = vst.msk [vmem:[%s134 + $0x78] sm:$0xff] %vm1424, %v1415
        %s1433 = sand.u32 %s52, 1
        %s1434 = scalar_lea.sflag [#allocation4], %s1433
        %s1435 = sand.u32 %s52, 1
        %s1436 = smul.addr %s1435, 128
        %s1437 = scalar_lea.vmem [#allocation5], %s1436
        // Predicated region
        $region29: #{denoiser_gaussian_forward.1} parent=23 // pred_check
          %p1438 = pneg %p62
        $region30: #{denoiser_gaussian_forward.1} parent=23 // pred_check_branch
          %1440 = sbr.rel (%p1438) target = $region32
        $region31: #{denoiser_gaussian_forward.1} parent=23 // pred_region
          %s1442 = ssub.s32 2048, 2048
          %1443 = vsyncadd %s1434, %s1442
          %s1444 = smul.addr %s18, 16
          %s1445 = smul.addr %s1444, 128
          %s1446 = scalar_lea.hbm %s1, %s1445
          %s1447 = sshll.u32 %s1437, 4
          %s1448 = int_to_ptr.vmem [resolvable:$true] %s1447
          %1453 = dma.vmem_to_hbm [thread:$0]  %s1448, 2048, %s1446, %s1434, 256, 256, 16
        $region32: #{denoiser_gaussian_forward.1} parent=23 // pred_fallthru
          _
      $region24: #{denoiser_gaussian_forward.1} parent=5 // pred_fallthru
        _
      %p1454 = scmp.le.s32.totalorder 2, %s13
      // Predicated region
      $region33: #{denoiser_gaussian_forward.1} parent=5 // pred_check
        %p1455 = pneg %p1454
      $region34: #{denoiser_gaussian_forward.1} parent=5 // pred_check_branch
        %1457 = sbr.rel (%p1455) target = $region36
      $region35: #{denoiser_gaussian_forward.1} parent=5 // pred_region
        %s1458 = ssub.s32 %s13, 2
        // Predicated region
        $region37: #{denoiser_gaussian_forward.1} parent=35 // pred_check
          %p1459 = pneg %p68
        $region38: #{denoiser_gaussian_forward.1} parent=35 // pred_check_branch
          %1461 = sbr.rel (%p1459) target = $region40
        $region39: #{denoiser_gaussian_forward.1} parent=35 // pred_region
          %s1462 = sand.u32 %s53, 1
          %s1463 = scalar_lea.sflag [#allocation4], %s1462
          %s1464 = sand.u32 %s53, 1
          %s1465 = smul.addr %s1464, 128
          %s1466 = scalar_lea.vmem [#allocation5], %s1465
          %1467 = dma.done %s1463, 2048
        $region40: #{denoiser_gaussian_forward.1} parent=35 // pred_fallthru
          _
      $region36: #{denoiser_gaussian_forward.1} parent=5 // pred_fallthru
        _
    $region6: #{denoiser_gaussian_forward.1} parent=1 // loop_footer
      %s17 = sadd.s32 1, %s13
    $region7: #{denoiser_gaussian_forward.1} parent=1 // loop_footer_branch
      %12 = sbr.rel target = $region3
    $region8: #{denoiser_gaussian_forward.1} parent=1 // loop_exit
      _
    %1468 = vsyncpa [#allocation3], 1
    %s1469 = scalar_lea.sflag [#allocation3], 1
    %1470 = vsyncpa %s1469, 1
    %1471 = vsyncpa [#allocation4], 1
    %s1472 = scalar_lea.sflag [#allocation4], 1
    %1473 = vsyncpa %s1472, 1

</llo_original>
